<compile_context>
chip_gen: v7x
topology: tpu7x:2x2x1
jax: 0.10.0
libtpu: 0.0.40
codegen_flags: <defaults>
</compile_context>

<pallas_src>
import jax
import jax.numpy as jnp
from jax import lax
from jax.experimental import pallas as pl
from jax.experimental.pallas import tpu as pltpu


def _round_up(x: int, m: int) -> int:
    return (x + m - 1) // m * m


def _conv_gelu_kernel(x_ref, w_ref, b_ref, o_ref, col_ref):
    # x_ref  : (T_x, GB*Cg)     full padded time axis for this (group-block, batch)
    # w_ref  : (GB, K*Cg, Cg)   tap-folded weights for the GB groups of this block
    # b_ref  : (1, GB*Cg)       bias slice for this group block
    # o_ref  : (T_tile, GB*Cg)  output tile, written straight into the (B, T, D) layout
    # col_ref: (T_tile, K*Cg)   im2col scratch (reused per group)
    gb, kcg, cg = w_ref.shape
    k_taps = kcg // cg
    t_tile = o_ref.shape[0]

    # Start row (padded coordinates) of this output tile; T_tile is a multiple of 8.
    t0 = pl.multiple_of(pl.program_id(2) * t_tile, 8)

    inv_sqrt2 = jnp.float32(0.7071067811865476)
    for g in range(gb):                       # static, small (groups per block)
        c0 = g * cg
        # Build the im2col slab: col[t, k*Cg + ci] = x[t0 + t + k, c0 + ci].
        # K shifted copies (sublane-misaligned for k % 8 != 0 is inherent to im2col), but they
        # feed a single large-contraction matmul instead of K tiny contraction-Cg matmuls.
        for k in range(k_taps):               # static; K is small for this module
            col_ref[:, k * cg:(k + 1) * cg] = x_ref[pl.ds(t0 + k, t_tile), c0:c0 + cg]
        # One MXU matmul per group, contraction = K*Cg, f32 accumulation.
        acc = jnp.dot(col_ref[...], w_ref[g], preferred_element_type=jnp.float32)
        acc = acc + b_ref[:, c0:c0 + cg].astype(jnp.float32)
        # Exact (erf) GELU — matches PyTorch nn.GELU(approximate='none').
        out = 0.5 * acc * (1.0 + lax.erf(acc * inv_sqrt2))
        o_ref[:, c0:c0 + cg] = out.astype(o_ref.dtype)


def _pick_groups_per_block(groups: int, cg: int) -> int:
    # Smallest divisor GB of `groups` with GB*Cg a multiple of 128 (lane-dense blocks);
    # fall back to all groups (block last dim == d_model, which is always a legal block).
    for gb in range(1, groups + 1):
        if groups % gb == 0 and (gb * cg) % 128 == 0:
            return gb
    return groups


def relative_positional_conv_embedding(x, weight_v, weight_g, bias,
                                       kernel_size: int, groups: int,
                                       *, compute_dtype=None, t_tile: int = 256):
    """x: (B, T, D) -> (B, T, D), matching the PyTorch module's forward."""
    B, T, D = x.shape
    assert D % groups == 0
    cg = D // groups
    K = kernel_size
    pad = K // 2
    if compute_dtype is None:
        compute_dtype = x.dtype   # bf16 recommended on v6e/v7x (f32 accumulation is kept)

    # ---- weight_norm(dim=2): per-tap norm over (out_ch, in_ch); no eps, same as PyTorch ----
    norm = jnp.sqrt(jnp.sum(weight_v * weight_v, axis=(0, 1), keepdims=True))
    w = weight_g * weight_v / norm                      # (D, Cg, K), PyTorch conv layout

    # Tap-folded per-group weight: w_fold[g, k*Cg + ci, co] = w[g*Cg + co, ci, k]
    w_fold = (w.reshape(groups, cg, cg, K)              # (g, co, ci, k)
                .transpose(0, 3, 2, 1)                  # (g, k, ci, co)
                .reshape(groups, K * cg, cg)
                .astype(compute_dtype))
    bias2d = bias.reshape(1, D).astype(jnp.float32)

    # ---- tiling ----
    gb = _pick_groups_per_block(groups, cg)
    cgb = gb * cg                                       # channels per group-block (block last dim)
    g_blocks = groups // gb

    t_tile = _round_up(min(t_tile, _round_up(T, 8)), 8)
    n_t = pl.cdiv(T, t_tile)
    t_out_pad = n_t * t_tile
    t_x = _round_up(t_out_pad + K - 1, 8)               # padded-time rows the kernel may touch

    # Time-only padding (conv "same" left pad + enough zeros on the right). Extra right rows are
    # zeros and only feed output rows >= T, which are sliced away below.
    x_pad = jnp.pad(x, ((0, 0), (pad, t_x - T - pad), (0, 0))).astype(compute_dtype)

    kcg = K * cg
    itemsize = jnp.dtype(compute_dtype).itemsize
    vmem_est = (2 * (t_x * cgb * itemsize               # x block (double-buffered)
                     + gb * kcg * cg * itemsize         # weight block
                     + cgb * 4                          # bias block
                     + t_tile * cgb * x.dtype.itemsize)  # output block
                + t_tile * kcg * itemsize)              # im2col scratch
    vmem_limit = int(min(max(2 * vmem_est, 16 * 1024 * 1024), 64 * 1024 * 1024))

    out = pl.pallas_call(
        _conv_gelu_kernel,
        out_shape=jax.ShapeDtypeStruct((B, t_out_pad, D), x.dtype),
        grid=(g_blocks, B, n_t),                        # group outermost -> weights fetched once/group
        in_specs=[
            pl.BlockSpec((None, t_x, cgb), lambda g, b, t: (b, 0, g)),   # x: fetched once per (g, b)
            pl.BlockSpec((gb, kcg, cg),    lambda g, b, t: (g, 0, 0)),   # w: fetched once per group-block
            pl.BlockSpec((1, cgb),         lambda g, b, t: (0, g)),      # bias slice
        ],
        out_specs=pl.BlockSpec((None, t_tile, cgb), lambda g, b, t: (b, t, g)),
        scratch_shapes=[pltpu.VMEM((t_tile, kcg), compute_dtype)],
        compiler_params=pltpu.CompilerParams(
            dimension_semantics=("parallel", "parallel", "arbitrary"),
            vmem_limit_bytes=vmem_limit),
    )(x_pad, w_fold, bias2d)

    # Even kernel_size: PyTorch drops the last conv frame (num_remove=1). We only ever compute
    # frames [0, T), so that drop is implicit; [:, :T] also strips the T-tile rounding rows.
    return out[:, :T, :]


def _reference(x, weight_v, weight_g, bias, kernel_size: int, groups: int):
    """Pure-JAX reference mirroring the PyTorch forward."""
    norm = jnp.sqrt(jnp.sum(weight_v * weight_v, axis=(0, 1), keepdims=True))
    w = weight_g * weight_v / norm
    xt = jnp.transpose(x, (0, 2, 1))                    # (B, D, T)
    out = lax.conv_general_dilated(
        xt, w, window_strides=(1,),
        padding=[(kernel_size // 2, kernel_size // 2)],
        dimension_numbers=("NCH", "OIH", "NCH"),
        feature_group_count=groups)
    out = out + bias[None, :, None]
    if kernel_size % 2 == 0:
        out = out[..., :-1]
    out = 0.5 * out * (1.0 + lax.erf(out / jnp.sqrt(jnp.float32(2.0))))
    return jnp.transpose(out, (0, 2, 1))


def _run_case(B, T, D, kernel_size, groups, seed, t_tile=256):
    cg = D // groups
    key = jax.random.PRNGKey(seed)
    kx, kv, kg, kb = jax.random.split(key, 4)
    x = jax.random.normal(kx, (B, T, D), dtype=jnp.float32)
    # Conv1d weight_v: (out_channels, in_channels//groups, kernel_size)
    weight_v = jax.random.normal(kv, (D, cg, kernel_size), dtype=jnp.float32) * 0.1
    # weight_norm(dim=2) gain: (1, 1, kernel_size)
    weight_g = jax.random.normal(kg, (1, 1, kernel_size), dtype=jnp.float32) * 0.5 + 1.0
    bias = jax.random.normal(kb, (D,), dtype=jnp.float32) * 0.1

    out = relative_positional_conv_embedding(x, weight_v, weight_g, bias,
                                             kernel_size, groups, t_tile=t_tile)
    out = jax.block_until_ready(out)

    ref = _reference(x, weight_v, weight_g, bias, kernel_size, groups)
    assert out.shape == (B, T, D)
    err = float(jnp.max(jnp.abs(out - ref)))
    assert jnp.allclose(out, ref, atol=1e-3, rtol=1e-3), f"max abs err = {err}"


if __name__ == "__main__":
    # Case 1: module-consistent small shapes — batch=2, num_frames=16, d_model=32,
    # kernel_size=4 (even -> exercises num_remove=1), groups=2 (full-d_model blocks).
    _run_case(B=2, T=16, D=32, kernel_size=4, groups=2, seed=0)
    # Case 2: exercises odd kernel, multiple group blocks (lane-dense 128-ch blocks),
    # multiple T tiles, and T not a multiple of the tile.
    _run_case(B=2, T=40, D=256, kernel_size=5, groups=2, seed=0, t_tile=16)

    print("KERNEL_OK")
</pallas_src>

<mosaic_0001>
module attributes {stable_mosaic.version = 11 : i64} {
  func.func @_conv_gelu_kernel(%arg0: i32, %arg1: i32, %arg2: i32, %arg3: memref<1x24x32xf32, #tpu.memory_space<vmem>>, %arg4: memref<2x64x16xf32, #tpu.memory_space<vmem>>, %arg5: memref<1x32xf32, #tpu.memory_space<vmem>>, %arg6: memref<1x16x32xf32, #tpu.memory_space<vmem>>, %arg7: memref<16x64xf32, #tpu.memory_space<vmem>>) attributes {dimension_semantics = [#tpu.dimension_semantics<parallel>, #tpu.dimension_semantics<parallel>, #tpu.dimension_semantics<arbitrary>], iteration_bounds = array<i64: 1, 2, 1>, scalar_prefetch = 0 : i64, scratch_operands = 1 : i64, tpu.core_type = #tpu.core_type<tc>, window_params = [{transform_indices = @transform_0, window_bounds = array<i64: 1, 24, 32>}, {transform_indices = @transform_1, window_bounds = array<i64: 2, 64, 16>}, {transform_indices = @transform_2, window_bounds = array<i64: 1, 32>}, {transform_indices = @transform_3, window_bounds = array<i64: 1, 16, 32>}]} {
    %c16_i32 = arith.constant 16 : i32
    %0 = arith.muli %arg2, %c16_i32 : i32
    %1 = tpu.assume_multiple %0, 8 : i32
    %c0_i32 = arith.constant 0 : i32
    %2 = arith.addi %1, %c0_i32 : i32
    %c0 = arith.constant 0 : index
    %3 = arith.index_cast %2 : i32 to index
    %c0_0 = arith.constant 0 : index
    %4 = vector.load %arg3[%c0, %3, %c0_0] : memref<1x24x32xf32, #tpu.memory_space<vmem>>, vector<1x16x16xf32>
    %5 = vector.shape_cast %4 : vector<1x16x16xf32> to vector<16x16xf32>
    %c0_1 = arith.constant 0 : index
    %c0_2 = arith.constant 0 : index
    %6 = vector.load %arg7[%c0_1, %c0_2] : memref<16x64xf32, #tpu.memory_space<vmem>>, vector<16x16xf32>
    tpu.vector_store %arg7[%c0_1, %c0_2], %5 {strides = array<i32>} : memref<16x64xf32, #tpu.memory_space<vmem>>, vector<16x16xf32>,
    %c1_i32 = arith.constant 1 : i32
    %7 = arith.addi %1, %c1_i32 : i32
    %c0_3 = arith.constant 0 : index
    %8 = arith.index_cast %7 : i32 to index
    %c0_4 = arith.constant 0 : index
    %9 = vector.load %arg3[%c0_3, %8, %c0_4] : memref<1x24x32xf32, #tpu.memory_space<vmem>>, vector<1x16x16xf32>
    %10 = vector.shape_cast %9 : vector<1x16x16xf32> to vector<16x16xf32>
    %c0_5 = arith.constant 0 : index
    %c16 = arith.constant 16 : index
    %11 = vector.load %arg7[%c0_5, %c16] : memref<16x64xf32, #tpu.memory_space<vmem>>, vector<16x16xf32>
    tpu.vector_store %arg7[%c0_5, %c16], %10 {strides = array<i32>} : memref<16x64xf32, #tpu.memory_space<vmem>>, vector<16x16xf32>,
    %c2_i32 = arith.constant 2 : i32
    %12 = arith.addi %1, %c2_i32 : i32
    %c0_6 = arith.constant 0 : index
    %13 = arith.index_cast %12 : i32 to index
    %c0_7 = arith.constant 0 : index
    %14 = vector.load %arg3[%c0_6, %13, %c0_7] : memref<1x24x32xf32, #tpu.memory_space<vmem>>, vector<1x16x16xf32>
    %15 = vector.shape_cast %14 : vector<1x16x16xf32> to vector<16x16xf32>
    %c0_8 = arith.constant 0 : index
    %c32 = arith.constant 32 : index
    %16 = vector.load %arg7[%c0_8, %c32] : memref<16x64xf32, #tpu.memory_space<vmem>>, vector<16x16xf32>
    tpu.vector_store %arg7[%c0_8, %c32], %15 {strides = array<i32>} : memref<16x64xf32, #tpu.memory_space<vmem>>, vector<16x16xf32>,
    %c3_i32 = arith.constant 3 : i32
    %17 = arith.addi %1, %c3_i32 : i32
    %c0_9 = arith.constant 0 : index
    %18 = arith.index_cast %17 : i32 to index
    %c0_10 = arith.constant 0 : index
    %19 = vector.load %arg3[%c0_9, %18, %c0_10] : memref<1x24x32xf32, #tpu.memory_space<vmem>>, vector<1x16x16xf32>
    %20 = vector.shape_cast %19 : vector<1x16x16xf32> to vector<16x16xf32>
    %c0_11 = arith.constant 0 : index
    %c48 = arith.constant 48 : index
    %21 = vector.load %arg7[%c0_11, %c48] : memref<16x64xf32, #tpu.memory_space<vmem>>, vector<16x16xf32>
    tpu.vector_store %arg7[%c0_11, %c48], %20 {strides = array<i32>} : memref<16x64xf32, #tpu.memory_space<vmem>>, vector<16x16xf32>,
    %c0_12 = arith.constant 0 : index
    %c0_13 = arith.constant 0 : index
    %22 = vector.load %arg7[%c0_12, %c0_13] : memref<16x64xf32, #tpu.memory_space<vmem>>, vector<16x64xf32>
    %c0_14 = arith.constant 0 : index
    %c0_15 = arith.constant 0 : index
    %c0_16 = arith.constant 0 : index
    %23 = vector.load %arg4[%c0_14, %c0_15, %c0_16] : memref<2x64x16xf32, #tpu.memory_space<vmem>>, vector<1x64x16xf32>
    %24 = vector.shape_cast %23 : vector<1x64x16xf32> to vector<64x16xf32>
    %cst = arith.constant dense<0.000000e+00> : vector<16x16xf32>
    %25 = tpu.matmul %22, %24, %cst {dimension_numbers = #tpu.dot_dimension_numbers<[1], [0], [0], [1], [0, 0, 1, 1], [], []>} : vector<16x64xf32>, vector<64x16xf32>, vector<16x16xf32> -> vector<16x16xf32>
    %c0_17 = arith.constant 0 : index
    %c0_18 = arith.constant 0 : index
    %26 = vector.load %arg5[%c0_17, %c0_18] : memref<1x32xf32, #tpu.memory_space<vmem>>, vector<1x16xf32>
    %27 = vector.broadcast %26 : vector<1x16xf32> to vector<16x16xf32>
    %28 = arith.addf %25, %27 : vector<16x16xf32>
    %cst_19 = arith.constant 5.000000e-01 : f32
    %29 = vector.broadcast %cst_19 : f32 to vector<16x16xf32>
    %30 = arith.mulf %29, %28 : vector<16x16xf32>
    %cst_20 = arith.constant 0.707106769 : f32
    %31 = vector.broadcast %cst_20 : f32 to vector<16x16xf32>
    %32 = arith.mulf %28, %31 : vector<16x16xf32>
    %33 = math.erf %32 : vector<16x16xf32>
    %cst_21 = arith.constant 1.000000e+00 : f32
    %34 = vector.broadcast %cst_21 : f32 to vector<16x16xf32>
    %35 = arith.addf %34, %33 : vector<16x16xf32>
    %36 = arith.mulf %30, %35 : vector<16x16xf32>
    %c0_22 = arith.constant 0 : index
    %c0_23 = arith.constant 0 : index
    %c0_24 = arith.constant 0 : index
    %37 = vector.load %arg6[%c0_22, %c0_23, %c0_24] : memref<1x16x32xf32, #tpu.memory_space<vmem>>, vector<1x16x16xf32>
    %38 = vector.shape_cast %37 : vector<1x16x16xf32> to vector<16x16xf32>
    %39 = vector.shape_cast %36 : vector<16x16xf32> to vector<1x16x16xf32>
    tpu.vector_store %arg6[%c0_22, %c0_23, %c0_24], %39 {strides = array<i32>} : memref<1x16x32xf32, #tpu.memory_space<vmem>>, vector<1x16x16xf32>,
    %c0_i32_25 = arith.constant 0 : i32
    %40 = arith.addi %1, %c0_i32_25 : i32
    %c0_26 = arith.constant 0 : index
    %41 = arith.index_cast %40 : i32 to index
    %c16_27 = arith.constant 16 : index
    %42 = vector.load %arg3[%c0_26, %41, %c16_27] : memref<1x24x32xf32, #tpu.memory_space<vmem>>, vector<1x16x16xf32>
    %43 = vector.shape_cast %42 : vector<1x16x16xf32> to vector<16x16xf32>
    %c0_28 = arith.constant 0 : index
    %c0_29 = arith.constant 0 : index
    %44 = vector.load %arg7[%c0_28, %c0_29] : memref<16x64xf32, #tpu.memory_space<vmem>>, vector<16x16xf32>
    tpu.vector_store %arg7[%c0_28, %c0_29], %43 {strides = array<i32>} : memref<16x64xf32, #tpu.memory_space<vmem>>, vector<16x16xf32>,
    %c1_i32_30 = arith.constant 1 : i32
    %45 = arith.addi %1, %c1_i32_30 : i32
    %c0_31 = arith.constant 0 : index
    %46 = arith.index_cast %45 : i32 to index
    %c16_32 = arith.constant 16 : index
    %47 = vector.load %arg3[%c0_31, %46, %c16_32] : memref<1x24x32xf32, #tpu.memory_space<vmem>>, vector<1x16x16xf32>
    %48 = vector.shape_cast %47 : vector<1x16x16xf32> to vector<16x16xf32>
    %c0_33 = arith.constant 0 : index
    %c16_34 = arith.constant 16 : index
    %49 = vector.load %arg7[%c0_33, %c16_34] : memref<16x64xf32, #tpu.memory_space<vmem>>, vector<16x16xf32>
    tpu.vector_store %arg7[%c0_33, %c16_34], %48 {strides = array<i32>} : memref<16x64xf32, #tpu.memory_space<vmem>>, vector<16x16xf32>,
    %c2_i32_35 = arith.constant 2 : i32
    %50 = arith.addi %1, %c2_i32_35 : i32
    %c0_36 = arith.constant 0 : index
    %51 = arith.index_cast %50 : i32 to index
    %c16_37 = arith.constant 16 : index
    %52 = vector.load %arg3[%c0_36, %51, %c16_37] : memref<1x24x32xf32, #tpu.memory_space<vmem>>, vector<1x16x16xf32>
    %53 = vector.shape_cast %52 : vector<1x16x16xf32> to vector<16x16xf32>
    %c0_38 = arith.constant 0 : index
    %c32_39 = arith.constant 32 : index
    %54 = vector.load %arg7[%c0_38, %c32_39] : memref<16x64xf32, #tpu.memory_space<vmem>>, vector<16x16xf32>
    tpu.vector_store %arg7[%c0_38, %c32_39], %53 {strides = array<i32>} : memref<16x64xf32, #tpu.memory_space<vmem>>, vector<16x16xf32>,
    %c3_i32_40 = arith.constant 3 : i32
    %55 = arith.addi %1, %c3_i32_40 : i32
    %c0_41 = arith.constant 0 : index
    %56 = arith.index_cast %55 : i32 to index
    %c16_42 = arith.constant 16 : index
    %57 = vector.load %arg3[%c0_41, %56, %c16_42] : memref<1x24x32xf32, #tpu.memory_space<vmem>>, vector<1x16x16xf32>
    %58 = vector.shape_cast %57 : vector<1x16x16xf32> to vector<16x16xf32>
    %c0_43 = arith.constant 0 : index
    %c48_44 = arith.constant 48 : index
    %59 = vector.load %arg7[%c0_43, %c48_44] : memref<16x64xf32, #tpu.memory_space<vmem>>, vector<16x16xf32>
    tpu.vector_store %arg7[%c0_43, %c48_44], %58 {strides = array<i32>} : memref<16x64xf32, #tpu.memory_space<vmem>>, vector<16x16xf32>,
    %c0_45 = arith.constant 0 : index
    %c0_46 = arith.constant 0 : index
    %60 = vector.load %arg7[%c0_45, %c0_46] : memref<16x64xf32, #tpu.memory_space<vmem>>, vector<16x64xf32>
    %c1 = arith.constant 1 : index
    %c0_47 = arith.constant 0 : index
    %c0_48 = arith.constant 0 : index
    %61 = vector.load %arg4[%c1, %c0_47, %c0_48] : memref<2x64x16xf32, #tpu.memory_space<vmem>>, vector<1x64x16xf32>
    %62 = vector.shape_cast %61 : vector<1x64x16xf32> to vector<64x16xf32>
    %cst_49 = arith.constant dense<0.000000e+00> : vector<16x16xf32>
    %63 = tpu.matmul %60, %62, %cst_49 {dimension_numbers = #tpu.dot_dimension_numbers<[1], [0], [0], [1], [0, 0, 1, 1], [], []>} : vector<16x64xf32>, vector<64x16xf32>, vector<16x16xf32> -> vector<16x16xf32>
    %c0_50 = arith.constant 0 : index
    %c16_51 = arith.constant 16 : index
    %64 = vector.load %arg5[%c0_50, %c16_51] : memref<1x32xf32, #tpu.memory_space<vmem>>, vector<1x16xf32>
    %65 = vector.broadcast %64 : vector<1x16xf32> to vector<16x16xf32>
    %66 = arith.addf %63, %65 : vector<16x16xf32>
    %cst_52 = arith.constant 5.000000e-01 : f32
    %67 = vector.broadcast %cst_52 : f32 to vector<16x16xf32>
    %68 = arith.mulf %67, %66 : vector<16x16xf32>
    %cst_53 = arith.constant 0.707106769 : f32
    %69 = vector.broadcast %cst_53 : f32 to vector<16x16xf32>
    %70 = arith.mulf %66, %69 : vector<16x16xf32>
    %71 = math.erf %70 : vector<16x16xf32>
    %cst_54 = arith.constant 1.000000e+00 : f32
    %72 = vector.broadcast %cst_54 : f32 to vector<16x16xf32>
    %73 = arith.addf %72, %71 : vector<16x16xf32>
    %74 = arith.mulf %68, %73 : vector<16x16xf32>
    %c0_55 = arith.constant 0 : index
    %c0_56 = arith.constant 0 : index
    %c16_57 = arith.constant 16 : index
    %75 = vector.load %arg6[%c0_55, %c0_56, %c16_57] : memref<1x16x32xf32, #tpu.memory_space<vmem>>, vector<1x16x16xf32>
    %76 = vector.shape_cast %75 : vector<1x16x16xf32> to vector<16x16xf32>
    %77 = vector.shape_cast %74 : vector<16x16xf32> to vector<1x16x16xf32>
    tpu.vector_store %arg6[%c0_55, %c0_56, %c16_57], %77 {strides = array<i32>} : memref<1x16x32xf32, #tpu.memory_space<vmem>>, vector<1x16x16xf32>,
    return
  }
  func.func @transform_0(%arg0: i32, %arg1: i32, %arg2: i32) -> (i32, i32, i32) {
    %c0_i32 = arith.constant 0 : i32
    %c0_i32_0 = arith.constant 0 : i32
    return %arg1, %c0_i32, %arg0 : i32, i32, i32
  }
  func.func @transform_1(%arg0: i32, %arg1: i32, %arg2: i32) -> (i32, i32, i32) {
    %c0_i32 = arith.constant 0 : i32
    %c0_i32_0 = arith.constant 0 : i32
    %c0_i32_1 = arith.constant 0 : i32
    return %arg0, %c0_i32, %c0_i32_0 : i32, i32, i32
  }
  func.func @transform_2(%arg0: i32, %arg1: i32, %arg2: i32) -> (i32, i32) {
    %c0_i32 = arith.constant 0 : i32
    %c0_i32_0 = arith.constant 0 : i32
    return %c0_i32, %arg0 : i32, i32
  }
  func.func @transform_3(%arg0: i32, %arg1: i32, %arg2: i32) -> (i32, i32, i32) {
    %c0_i32 = arith.constant 0 : i32
    return %arg1, %arg2, %arg0 : i32, i32, i32
  }
}

</mosaic_0001>

<llo_original>
// kernel: tpu_custom_call.1
$region0: #{tpu_custom_call.1}
  #allocation0 [shape = 'u32[]', space=smem, size = 0x4, offset = 0x4, fixed_abs, tag = 'smem constant byte address 0x4 - core index']
  #allocation1 [shape = 'u32[144,128]{1,0:T(1,128)}', space=vmem, size = 0x12000, scoped, tag = 'internal scratch']
  #allocation2 [shape = 'f32[16,64]{1,0:T(8,128)}', space=vmem, size = 0x2000, scoped, tag = 'scratch operand']
  %s0 = inlined_call_operand.vmem [shape: f32[2,24,32], index: 0, kind: input, shape index: {}]
  %s1 = inlined_call_operand.vmem [shape: f32[2,64,16], index: 1, kind: input, shape index: {}]
  %s2 = inlined_call_operand.vmem [shape: f32[1,32], index: 2, kind: input, shape index: {}]
  %s3 = inlined_call_operand.hbm [shape: f32[2,16,32], index: 3, kind: output, shape index: {}]
  %s4 = sld [smem:[#allocation0]]
  $region45: #{tpu_custom_call.1} parent=0
    _
  %s6 = ssub.s32 1, %s4
  %s7 = scalar_select 0, %s6, %s4
  $region1: #{tpu_custom_call.1} parent=0
    #allocation3 [shape = 'u8[16384]{0}', space=vmem, size = 0x4000, scoped, tag = 'output window, operand 0']
    #allocation4 [shape = 's32[2]{0}', space=sflag, size = 0x8, scoped, tag = 'scoped memory for tpu_custom_call.1']
    %8 = vsyncpa [#allocation4], 0
    %s9 = scalar_lea.sflag [#allocation4], 1
    %10 = vsyncpa %s9, 0
    loop: start=0, step=1, limit=4
    $region2: #{tpu_custom_call.1} parent=1 // loop_pre_header
      _
    $region3: #{tpu_custom_call.1} parent=1 // loop_header
      %s12 = sphi 0, %s16
      %p13 = scmp.ge.s32.totalorder %s12, 4
      %s19 = sphi 0, %s38
      %s20 = sphi 0, %s34
      %s21 = sphi 0, %s30
      %s22 = sphi 0, %s19
      %s23 = sphi 0, %s20
      %s24 = sphi 0, %s21
      %s25 = sphi 0, %s22
      %s26 = sphi 0, %s23
      %s27 = sphi 0, %s24
      %s43 = sphi 0, %s45
      %s46 = sphi 0, %s43
      %s47 = sphi 0, %s46
      %s63 = sphi 0, %s47
      %s69 = sphi 0, %s71
      %s72 = sphi 0, %s69
      %s73 = sphi 0, %s72
      %s89 = sphi 0, %s73
      %s95 = sphi 0, %s97
      %s98 = sphi 0, %s95
      %s99 = sphi 0, %s98
      %s115 = sphi 0, %s99
      %s125 = sphi 0, %s127
      %s128 = sphi 0, %s125
      %s129 = sphi 0, %s128
      %s145 = sphi 0, %s129
    $region4: #{tpu_custom_call.1} parent=1 // loop_header_branch
      %15 = sbr.rel (%p13) target = $region8
    $region5: #{tpu_custom_call.1} parent=1 // loop_body
      %s17 = ssub.s32 %s12, 1
      %s18 = ssub.s32 %s12, 2
      %s28 = sadd.s32 1, %s21
      %p29 = scmp.ge.s32.totalorder %s28, 1
      %s30 = scalar_select %p29, 0, %s28
      %s31 = sadd.s32 1, %s20
      %s32 = scalar_select %p29, %s31, %s20
      %p33 = scmp.ge.s32.totalorder %s32, 2
      %s34 = scalar_select %p33, 0, %s32
      %s35 = sadd.s32 1, %s19
      %s36 = scalar_select %p33, %s35, %s19
      %p37 = scmp.ge.s32.totalorder %s36, 1
      %s38 = scalar_select %p37, 0, %s36
      %s39 = ssub.s32 %s20, %s34
      %s40 = ssub.s32 %s19, %s38
      %s41 = sor.u32 %s39, %s40
      %p42 = scmp.eq.s32.totalorder %s41, 0
      %s44 = sadd.s32 %s43, 1
      %s45 = scalar_select %p42, %s43, %s44
      %p48 = pneg %p42
      %p49 = scmp.eq.s32.totalorder %s12, 1
      %p50 = por %p48, %p49
      %p51 = scmp.ne.s32.totalorder %s43, %s46
      %p52 = scmp.eq.s32.totalorder %s12, 0
      %p53 = por %p51, %p52
      %p54 = scmp.ne.s32.totalorder %s43, %s46
      %p55 = scmp.eq.s32.totalorder %s17, 1
      %p56 = por %p54, %p55
      %p57 = scmp.ne.s32.totalorder %s46, %s47
      %p58 = scmp.eq.s32.totalorder %s17, 0
      %p59 = por %p57, %p58
      %p60 = scmp.ne.s32.totalorder %s46, %s47
      %p61 = scmp.eq.s32.totalorder %s18, 1
      %p62 = por %p60, %p61
      %p64 = scmp.ne.s32.totalorder %s47, %s63
      %p65 = scmp.eq.s32.totalorder %s18, 0
      %p66 = por %p64, %p65
      %s67 = ssub.s32 %s19, %s38
      %p68 = scmp.eq.s32.totalorder %s67, 0
      %s70 = sadd.s32 %s69, 1
      %s71 = scalar_select %p68, %s69, %s70
      %p74 = pneg %p68
      %p75 = scmp.eq.s32.totalorder %s12, 1
      %p76 = por %p74, %p75
      %p77 = scmp.ne.s32.totalorder %s69, %s72
      %p78 = scmp.eq.s32.totalorder %s12, 0
      %p79 = por %p77, %p78
      %p80 = scmp.ne.s32.totalorder %s69, %s72
      %p81 = scmp.eq.s32.totalorder %s17, 1
      %p82 = por %p80, %p81
      %p83 = scmp.ne.s32.totalorder %s72, %s73
      %p84 = scmp.eq.s32.totalorder %s17, 0
      %p85 = por %p83, %p84
      %p86 = scmp.ne.s32.totalorder %s72, %s73
      %p87 = scmp.eq.s32.totalorder %s18, 1
      %p88 = por %p86, %p87
      %p90 = scmp.ne.s32.totalorder %s73, %s89
      %p91 = scmp.eq.s32.totalorder %s18, 0
      %p92 = por %p90, %p91
      %s93 = ssub.s32 %s19, %s38
      %p94 = scmp.eq.s32.totalorder %s93, 0
      %s96 = sadd.s32 %s95, 1
      %s97 = scalar_select %p94, %s95, %s96
      %p100 = pneg %p94
      %p101 = scmp.eq.s32.totalorder %s12, 1
      %p102 = por %p100, %p101
      %p103 = scmp.ne.s32.totalorder %s95, %s98
      %p104 = scmp.eq.s32.totalorder %s12, 0
      %p105 = por %p103, %p104
      %p106 = scmp.ne.s32.totalorder %s95, %s98
      %p107 = scmp.eq.s32.totalorder %s17, 1
      %p108 = por %p106, %p107
      %p109 = scmp.ne.s32.totalorder %s98, %s99
      %p110 = scmp.eq.s32.totalorder %s17, 0
      %p111 = por %p109, %p110
      %p112 = scmp.ne.s32.totalorder %s98, %s99
      %p113 = scmp.eq.s32.totalorder %s18, 1
      %p114 = por %p112, %p113
      %p116 = scmp.ne.s32.totalorder %s99, %s115
      %p117 = scmp.eq.s32.totalorder %s18, 0
      %p118 = por %p116, %p117
      %s119 = ssub.s32 %s20, %s34
      %s120 = ssub.s32 %s21, %s30
      %s121 = sor.u32 %s119, %s120
      %s122 = ssub.s32 %s19, %s38
      %s123 = sor.u32 %s121, %s122
      %p124 = scmp.eq.s32.totalorder %s123, 0
      %s126 = sadd.s32 %s125, 1
      %s127 = scalar_select %p124, %s125, %s126
      %p130 = pneg %p124
      %p131 = scmp.eq.s32.totalorder %s12, 1
      %p132 = por %p130, %p131
      %p133 = scmp.ne.s32.totalorder %s125, %s128
      %p134 = scmp.eq.s32.totalorder %s12, 0
      %p135 = por %p133, %p134
      %p136 = scmp.ne.s32.totalorder %s125, %s128
      %p137 = scmp.eq.s32.totalorder %s17, 1
      %p138 = por %p136, %p137
      %p139 = scmp.ne.s32.totalorder %s128, %s129
      %p140 = scmp.eq.s32.totalorder %s17, 0
      %p141 = por %p139, %p140
      %p142 = scmp.ne.s32.totalorder %s128, %s129
      %p143 = scmp.eq.s32.totalorder %s18, 1
      %p144 = por %p142, %p143
      %p146 = scmp.ne.s32.totalorder %s129, %s145
      %p147 = scmp.eq.s32.totalorder %s18, 0
      %p148 = por %p146, %p147
      %p149 = scmp.le.s32.totalorder 1, %s12
      %p150 = scmp.lt.s32.totalorder %s12, 3
      %p151 = pnand %p149, %p150
      %p152 = pneg %p151
      // Predicated region
      $region9: #{tpu_custom_call.1} parent=5 // pred_check
        _
      $region10: #{tpu_custom_call.1} parent=5 // pred_check_branch
        %154 = sbr.rel (%p151) target = $region12
      $region11: #{tpu_custom_call.1} parent=5 // pred_region
        %s155 = ssub.s32 %s12, 1
        // Predicated region
        $region13: #{tpu_custom_call.1} parent=11 // pred_check
          %p156 = pneg %p85
        $region14: #{tpu_custom_call.1} parent=11 // pred_check_branch
          %158 = sbr.rel (%p156) target = $region16
        $region15: #{tpu_custom_call.1} parent=11 // pred_region
          %s159 = smul.u32 2, %s22
          %p160 = scmp.lt.s32.totalorder %s159, 1
          %s161 = scalar_select %p160, %s159, 1
          %s162 = smul.addr %s161, 8
          %s163 = smul.addr %s162, 8
          %s164 = scalar_lea.vmem %s1, %s163
          %s165 = smul.u32 2, %s22
        $region16: #{tpu_custom_call.1} parent=11 // pred_fallthru
          _
        // Predicated region
        $region17: #{tpu_custom_call.1} parent=11 // pred_check
          %p166 = pneg %p111
        $region18: #{tpu_custom_call.1} parent=11 // pred_check_branch
          %168 = sbr.rel (%p166) target = $region20
        $region19: #{tpu_custom_call.1} parent=11 // pred_region
          %p169 = scmp.lt.s32.totalorder %s22, 0
          %s170 = scalar_select %p169, %s22, 0
          %s171 = scalar_lea.vmem %s2, %s170
        $region20: #{tpu_custom_call.1} parent=11 // pred_fallthru
          _
      $region12: #{tpu_custom_call.1} parent=5 // pred_fallthru
        _
      %p172 = scmp.lt.s32.totalorder %s12, 2
      // Predicated region
      $region21: #{tpu_custom_call.1} parent=5 // pred_check
        %p173 = pneg %p172
      $region22: #{tpu_custom_call.1} parent=5 // pred_check_branch
        %175 = sbr.rel (%p173) target = $region24
      $region23: #{tpu_custom_call.1} parent=5 // pred_region
        // Predicated region
        $region25: #{tpu_custom_call.1} parent=23 // pred_check
          %p176 = pneg %p53
        $region26: #{tpu_custom_call.1} parent=23 // pred_check_branch
          %178 = sbr.rel (%p176) target = $region28
        $region27: #{tpu_custom_call.1} parent=23 // pred_region
          %p179 = scmp.lt.s32.totalorder %s20, 1
          %s180 = scalar_select %p179, %s20, 1
          %p181 = scmp.lt.s32.totalorder %s19, 0
          %s182 = scalar_select %p181, %s19, 0
          %s183 = smul.addr %s180, 3
          %s184 = sadd.s32 %s182, %s183
          %s185 = smul.addr %s184, 8
          %s186 = scalar_lea.vmem %s0, %s185
        $region28: #{tpu_custom_call.1} parent=23 // pred_fallthru
          _
      $region24: #{tpu_custom_call.1} parent=5 // pred_fallthru
        _
      %p187 = scmp.le.s32.totalorder 1, %s12
      %p188 = scmp.lt.s32.totalorder %s12, 3
      %p189 = pnand %p187, %p188
      %p190 = pneg %p189
      // Predicated region
      $region29: #{tpu_custom_call.1} parent=5 // pred_check
        _
      $region30: #{tpu_custom_call.1} parent=5 // pred_check_branch
        %192 = sbr.rel (%p189) target = $region32
      $region31: #{tpu_custom_call.1} parent=5 // pred_region
        %s193 = ssub.s32 %s12, 1
        %p194 = scmp.lt.s32.totalorder %s23, 1
        %s195 = scalar_select %p194, %s23, 1
        %p196 = scmp.lt.s32.totalorder %s22, 0
        %s197 = scalar_select %p196, %s22, 0
        %s198 = smul.addr %s195, 3
        %s199 = sadd.s32 %s197, %s198
        %s200 = smul.addr %s199, 8
        %s201 = scalar_lea.vmem %s0, %s200
        %p202 = pneg %p59
        %p203 = pneg %p56
        %s204 = smul.u32 2, %s22
        %p205 = scmp.lt.s32.totalorder %s204, 1
        %s206 = scalar_select %p205, %s204, 1
        %s207 = smul.addr %s206, 8
        %s208 = smul.addr %s207, 8
        %s209 = scalar_lea.vmem %s1, %s208
        %p210 = pneg %p85
        %p211 = pneg %p82
        %p212 = scmp.lt.s32.totalorder %s22, 0
        %s213 = scalar_select %p212, %s22, 0
        %s214 = scalar_lea.vmem %s2, %s213
        %p215 = pneg %p111
        %p216 = pneg %p108
        %p217 = pneg %p141
        %p218 = pneg %p138
        %s219 = sand.u32 %s128, 1
        %s220 = scalar_lea.sflag [#allocation4], %s219
        %s221 = sand.u32 %s128, 1
        %s222 = smul.addr %s221, 16
        %s223 = scalar_lea.vmem [#allocation3], %s222
        %p224 = scmp.lt.s32.totalorder %s23, 1
        %s225 = scalar_select %p224, %s23, 1
        %p226 = scmp.lt.s32.totalorder %s22, 0
        %s227 = scalar_select %p226, %s22, 0
        %s228 = smul.addr %s225, 3
        %s229 = sadd.s32 %s227, %s228
        %s230 = smul.addr %s229, 8
        %s231 = scalar_lea.vmem %s0, %s230
        %s232 = smul.u32 2, %s22
        %p233 = scmp.lt.s32.totalorder %s232, 1
        %s234 = scalar_select %p233, %s232, 1
        %s235 = smul.addr %s234, 8
        %s236 = smul.addr %s235, 8
        %s237 = scalar_lea.vmem %s1, %s236
        %s238 = smul.u32 2, %s22
        %p239 = scmp.lt.s32.totalorder %s22, 0
        %s240 = scalar_select %p239, %s22, 0
        %s241 = scalar_lea.vmem %s2, %s240
        %s242 = smul.u32 2, %s24
        %s243 = smul.u32 %s24, 16
        %s244 = scalar_lea.vmem %s231, %s243
        %v245 = vld [vmem:[%s244] sm:$0xff]
        %v246 = vld [vmem:[%s244 + $0x8] sm:$0xff]
        %vm247 = vcmask 130048
        %248 = vst.msk [vmem:[#allocation2] sm:$0xff] %vm247, %v245
        %249 = vst.msk [vmem:[#allocation2 + $0x8] sm:$0xff] %vm247, %v246
        %s250 = sadd.s32 %s243, 1
        %s251 = scalar_lea.vmem %s231, %s250
        %v252 = vld [vmem:[%s251] sm:$0xff]
        %v253 = vld [vmem:[%s251 + $0x8] sm:$0xff]
        %256 = vrot.lane.b32.xlu0 %v252, 16
        %v257 = vpop.permute.xlu0 %256
        %258 = vrot.lane.b32.xlu0 %v253, 16
        %v259 = vpop.permute.xlu0 %258
        %vm262 = vcmask 261248
        %263 = vst.msk [vmem:[#allocation2] sm:$0xff] %vm262, %v257
        %264 = vst.msk [vmem:[#allocation2 + $0x8] sm:$0xff] %vm262, %v259
        %s265 = sadd.s32 %s243, 2
        %s266 = scalar_lea.vmem %s231, %s265
        %v267 = vld [vmem:[%s266] sm:$0xff]
        %v268 = vld [vmem:[%s266 + $0x8] sm:$0xff]
        %271 = vrot.lane.b32.xlu0 %v267, 32
        %v272 = vpop.permute.xlu0 %271
        %273 = vrot.lane.b32.xlu0 %v268, 32
        %v274 = vpop.permute.xlu0 %273
        %vm277 = vcmask 392448
        %278 = vst.msk [vmem:[#allocation2] sm:$0xff] %vm277, %v272
        %279 = vst.msk [vmem:[#allocation2 + $0x8] sm:$0xff] %vm277, %v274
        %s280 = sadd.s32 %s243, 3
        %s281 = scalar_lea.vmem %s231, %s280
        %v282 = vld [vmem:[%s281] sm:$0xff]
        %v283 = vld [vmem:[%s281 + $0x8] sm:$0xff]
        %286 = vrot.lane.b32.xlu0 %v282, 48
        %v287 = vpop.permute.xlu0 %286
        %288 = vrot.lane.b32.xlu0 %v283, 48
        %v289 = vpop.permute.xlu0 %288
        %vm292 = vcmask 523648
        %293 = vst.msk [vmem:[#allocation2] sm:$0xff] %vm292, %v287
        %294 = vst.msk [vmem:[#allocation2 + $0x8] sm:$0xff] %vm292, %v289
        %v295 = vld [vmem:[#allocation2] sm:$0xff]
        %v296 = vld [vmem:[#allocation2 + $0x8] sm:$0xff]
        %v297 = vld [vmem:[%s237] sm:$0xff]
        %v298 = vld [vmem:[%s237 + $0x8] sm:$0xff]
        %v299 = vld [vmem:[%s237 + $0x10] sm:$0xff]
        %v300 = vld [vmem:[%s237 + $0x18] sm:$0xff]
        %v301 = vld [vmem:[%s237 + $0x20] sm:$0xff]
        %v302 = vld [vmem:[%s237 + $0x28] sm:$0xff]
        %v303 = vld [vmem:[%s237 + $0x30] sm:$0xff]
        %v304 = vld [vmem:[%s237 + $0x38] sm:$0xff]
        %v305 = vld [vmem:[%s241] sm:$0x1]
        %v307 = vlaneseq
        %v308 = vshrl.u32 %v307, 7
        %v309 = vsub.s32 0, %v308
        %v310 = vrot.slane %v305, %v309
        %vm312 = vcmask 523264
        %v314 = vsel %vm312, %v295, 0
        %v317 = vsel %vm312, %v296, 0
        %319 = vmatprep.subr.mxu0 0.0
        %320 = vmatpush1.msra.mxu0 %v297
        %321 = vmatprep.subr.mxu0 0.0
        %322 = vmatpush1.msra.mxu0 %v298
        %323 = vmatprep.subr.mxu0 0.0
        %324 = vmatpush1.msra.mxu0 %v299
        %325 = vmatprep.subr.mxu0 0.0
        %326 = vmatpush1.msra.mxu0 %v300
        %327 = vmatprep.subr.mxu0 0.0
        %328 = vmatpush1.msra.mxu0 %v301
        %329 = vmatprep.subr.mxu0 0.0
        %330 = vmatpush1.msra.mxu0 %v302
        %331 = vmatprep.subr.mxu0 0.0
        %332 = vmatpush1.msra.mxu0 %v303
        %333 = vmatprep.subr.mxu0 0.0
        %334 = vmatpush1.msra.mxu0 %v304
        %335 = vmatprep.subr.mxu0 0.0
        %336 = vmatpush1.msra.mxu0 0.0
        %337 = vmatprep.subr.mxu0 0.0
        %338 = vmatpush1.msra.mxu0 0.0
        %339 = vmatprep.subr.mxu0 0.0
        %340 = vmatpush1.msra.mxu0 0.0
        %341 = vmatprep.subr.mxu0 0.0
        %342 = vmatpush1.msra.mxu0 0.0
        %343 = vmatprep.subr.mxu0 0.0
        %344 = vmatpush1.msra.mxu0 0.0
        %345 = vmatprep.subr.mxu0 0.0
        %346 = vmatpush1.msra.mxu0 0.0
        %347 = vmatprep.subr.mxu0 0.0
        %348 = vmatpush1.msra.mxu0 0.0
        %349 = vmatprep.subr.mxu0 0.0
        %350 = vmatpush1.msra.mxu0 0.0
        %351 = vmatprep.subr.mxu0 0.0
        %352 = vmatpush1.msra.mxu0 0.0
        %353 = vmatprep.subr.mxu0 0.0
        %354 = vmatpush1.msra.mxu0 0.0
        %355 = vmatprep.subr.mxu0 0.0
        %356 = vmatpush1.msra.mxu0 0.0
        %357 = vmatprep.subr.mxu0 0.0
        %358 = vmatpush1.msra.mxu0 0.0
        %359 = vmatprep.subr.mxu0 0.0
        %360 = vmatpush1.msra.mxu0 0.0
        %361 = vmatprep.subr.mxu0 0.0
        %362 = vmatpush1.msra.mxu0 0.0
        %363 = vmatprep.subr.mxu0 0.0
        %364 = vmatpush1.msra.mxu0 0.0
        %365 = vmatprep.subr.mxu0 0.0
        %366 = vmatpush1.msra.mxu0 0.0
        %367 = vmatprep.subr.mxu0 0.0
        %368 = vmatpush1.msra.mxu0 0.0
        %369 = vmatprep.subr.mxu0 0.0
        %370 = vmatpush1.msra.mxu0 0.0
        %371 = vmatprep.subr.mxu0 0.0
        %372 = vmatpush1.msra.mxu0 0.0
        %373 = vmatprep.subr.mxu0 0.0
        %374 = vmatpush1.msra.mxu0 0.0
        %375 = vmatprep.subr.mxu0 0.0
        %376 = vmatpush1.msra.mxu0 0.0
        %377 = vmatprep.subr.mxu0 0.0
        %378 = vmatpush1.msra.mxu0 0.0
        %379 = vmatprep.subr.mxu0 0.0
        %380 = vmatpush1.msra.mxu0 0.0
        %381 = vmatprep.subr.mxu0 0.0
        %382 = vmatpush1.msra.mxu0 0.0
        %383 = vmatprep.mubr.f32.mxu0 0.0
        %384 = vmatmul.mubr.f32.gmra.mrb[0].mxu0 %v314
        %v385 = vpop.f32.mrb[0].mxu0
        %v386 = vadd.f32 %v310, %v385
        %v387 = vpop.f32.mrb[0].mxu0
        %388 = vmatprep.mubr.f32.mxu0 0.0
        %389 = vmatmul.mubr.f32.gmra.mrb[0].mxu0 %v317
        %v390 = vpop.f32.mrb[0].mxu0
        %v391 = vadd.f32 %v310, %v390
        %v392 = vpop.f32.mrb[0].mxu0
        %393 = vdwg.mxu0
        %v394 = vmul.f32 %v386, 0.5
        %v395 = vmul.f32 %v391, 0.5
        %v396 = vmul.f32 %v386, 0.70710677
        %v397 = vmul.f32 %v391, 0.70710677
        %v398 = verf.f32.pop %v396
        %v399 = verf.f32.pop %v397
        %v400 = vadd.f32 %v398, 1.0
        %v401 = vadd.f32 %v399, 1.0
        %v402 = vmul.f32 %v394, %v400
        %v403 = vmul.f32 %v395, %v401
        %404 = vst.msk [vmem:[%s223] sm:$0xff] %vm247, %v402
        %405 = vst.msk [vmem:[%s223 + $0x8] sm:$0xff] %vm247, %v403
        %v406 = vld [vmem:[%s244] sm:$0xff]
        %v407 = vld [vmem:[%s244 + $0x8] sm:$0xff]
        %410 = vrot.lane.b32.xlu0 %v406, 112
        %v411 = vpop.permute.xlu0 %410
        %412 = vrot.lane.b32.xlu0 %v407, 112
        %v413 = vpop.permute.xlu0 %412
        %416 = vst.msk [vmem:[#allocation2] sm:$0xff] %vm247, %v411
        %417 = vst.msk [vmem:[#allocation2 + $0x8] sm:$0xff] %vm247, %v413
        %v418 = vld [vmem:[%s251] sm:$0xff]
        %v419 = vld [vmem:[%s251 + $0x8] sm:$0xff]
        %420 = vst.msk [vmem:[#allocation2] sm:$0xff] %vm262, %v418
        %421 = vst.msk [vmem:[#allocation2 + $0x8] sm:$0xff] %vm262, %v419
        %v422 = vld [vmem:[%s266] sm:$0xff]
        %v423 = vld [vmem:[%s266 + $0x8] sm:$0xff]
        %426 = vrot.lane.b32.xlu0 %v422, 16
        %v427 = vpop.permute.xlu0 %426
        %428 = vrot.lane.b32.xlu0 %v423, 16
        %v429 = vpop.permute.xlu0 %428
        %432 = vst.msk [vmem:[#allocation2] sm:$0xff] %vm277, %v427
        %433 = vst.msk [vmem:[#allocation2 + $0x8] sm:$0xff] %vm277, %v429
        %v434 = vld [vmem:[%s281] sm:$0xff]
        %v435 = vld [vmem:[%s281 + $0x8] sm:$0xff]
        %438 = vrot.lane.b32.xlu0 %v434, 32
        %v439 = vpop.permute.xlu0 %438
        %440 = vrot.lane.b32.xlu0 %v435, 32
        %v441 = vpop.permute.xlu0 %440
        %444 = vst.msk [vmem:[#allocation2] sm:$0xff] %vm292, %v439
        %445 = vst.msk [vmem:[#allocation2 + $0x8] sm:$0xff] %vm292, %v441
        %v446 = vld [vmem:[#allocation2] sm:$0xff]
        %v447 = vld [vmem:[#allocation2 + $0x8] sm:$0xff]
        %s448 = scalar_lea.vmem %s237, 64
        %v449 = vld [vmem:[%s448] sm:$0xff]
        %v450 = vld [vmem:[%s448 + $0x8] sm:$0xff]
        %v451 = vld [vmem:[%s448 + $0x10] sm:$0xff]
        %v452 = vld [vmem:[%s448 + $0x18] sm:$0xff]
        %v453 = vld [vmem:[%s448 + $0x20] sm:$0xff]
        %v454 = vld [vmem:[%s448 + $0x28] sm:$0xff]
        %v455 = vld [vmem:[%s448 + $0x30] sm:$0xff]
        %v456 = vld [vmem:[%s448 + $0x38] sm:$0xff]
        %v457 = vld [vmem:[%s241] sm:$0x1]
        %v459 = vlaneseq
        %v460 = vshrl.u32 %v459, 7
        %v461 = vsub.s32 0, %v460
        %v462 = vrot.slane %v457, %v461
        %463 = vrot.lane.b32.xlu0 %v462, 112
        %v464 = vpop.permute.xlu0 %463
        %v467 = vsel %vm312, %v446, 0
        %v470 = vsel %vm312, %v447, 0
        %472 = vmatprep.subr.mxu0 0.0
        %473 = vmatpush1.msra.mxu0 %v449
        %474 = vmatprep.subr.mxu0 0.0
        %475 = vmatpush1.msra.mxu0 %v450
        %476 = vmatprep.subr.mxu0 0.0
        %477 = vmatpush1.msra.mxu0 %v451
        %478 = vmatprep.subr.mxu0 0.0
        %479 = vmatpush1.msra.mxu0 %v452
        %480 = vmatprep.subr.mxu0 0.0
        %481 = vmatpush1.msra.mxu0 %v453
        %482 = vmatprep.subr.mxu0 0.0
        %483 = vmatpush1.msra.mxu0 %v454
        %484 = vmatprep.subr.mxu0 0.0
        %485 = vmatpush1.msra.mxu0 %v455
        %486 = vmatprep.subr.mxu0 0.0
        %487 = vmatpush1.msra.mxu0 %v456
        %488 = vmatprep.subr.mxu0 0.0
        %489 = vmatpush1.msra.mxu0 0.0
        %490 = vmatprep.subr.mxu0 0.0
        %491 = vmatpush1.msra.mxu0 0.0
        %492 = vmatprep.subr.mxu0 0.0
        %493 = vmatpush1.msra.mxu0 0.0
        %494 = vmatprep.subr.mxu0 0.0
        %495 = vmatpush1.msra.mxu0 0.0
        %496 = vmatprep.subr.mxu0 0.0
        %497 = vmatpush1.msra.mxu0 0.0
        %498 = vmatprep.subr.mxu0 0.0
        %499 = vmatpush1.msra.mxu0 0.0
        %500 = vmatprep.subr.mxu0 0.0
        %501 = vmatpush1.msra.mxu0 0.0
        %502 = vmatprep.subr.mxu0 0.0
        %503 = vmatpush1.msra.mxu0 0.0
        %504 = vmatprep.subr.mxu0 0.0
        %505 = vmatpush1.msra.mxu0 0.0
        %506 = vmatprep.subr.mxu0 0.0
        %507 = vmatpush1.msra.mxu0 0.0
        %508 = vmatprep.subr.mxu0 0.0
        %509 = vmatpush1.msra.mxu0 0.0
        %510 = vmatprep.subr.mxu0 0.0
        %511 = vmatpush1.msra.mxu0 0.0
        %512 = vmatprep.subr.mxu0 0.0
        %513 = vmatpush1.msra.mxu0 0.0
        %514 = vmatprep.subr.mxu0 0.0
        %515 = vmatpush1.msra.mxu0 0.0
        %516 = vmatprep.subr.mxu0 0.0
        %517 = vmatpush1.msra.mxu0 0.0
        %518 = vmatprep.subr.mxu0 0.0
        %519 = vmatpush1.msra.mxu0 0.0
        %520 = vmatprep.subr.mxu0 0.0
        %521 = vmatpush1.msra.mxu0 0.0
        %522 = vmatprep.subr.mxu0 0.0
        %523 = vmatpush1.msra.mxu0 0.0
        %524 = vmatprep.subr.mxu0 0.0
        %525 = vmatpush1.msra.mxu0 0.0
        %526 = vmatprep.subr.mxu0 0.0
        %527 = vmatpush1.msra.mxu0 0.0
        %528 = vmatprep.subr.mxu0 0.0
        %529 = vmatpush1.msra.mxu0 0.0
        %530 = vmatprep.subr.mxu0 0.0
        %531 = vmatpush1.msra.mxu0 0.0
        %532 = vmatprep.subr.mxu0 0.0
        %533 = vmatpush1.msra.mxu0 0.0
        %534 = vmatprep.subr.mxu0 0.0
        %535 = vmatpush1.msra.mxu0 0.0
        %536 = vmatprep.mubr.f32.mxu0 0.0
        %537 = vmatmul.mubr.f32.gmra.mrb[0].mxu0 %v467
        %v538 = vpop.f32.mrb[0].mxu0
        %v539 = vadd.f32 %v464, %v538
        %v540 = vpop.f32.mrb[0].mxu0
        %541 = vmatprep.mubr.f32.mxu0 0.0
        %542 = vmatmul.mubr.f32.gmra.mrb[0].mxu0 %v470
        %v543 = vpop.f32.mrb[0].mxu0
        %v544 = vadd.f32 %v464, %v543
        %v545 = vpop.f32.mrb[0].mxu0
        %546 = vdwg.mxu0
        %v547 = vmul.f32 %v539, 0.5
        %v548 = vmul.f32 %v544, 0.5
        %v549 = vmul.f32 %v539, 0.70710677
        %v550 = vmul.f32 %v544, 0.70710677
        %v551 = verf.f32.pop %v549
        %v552 = verf.f32.pop %v550
        %v553 = vadd.f32 %v551, 1.0
        %v554 = vadd.f32 %v552, 1.0
        %v555 = vmul.f32 %v547, %v553
        %v556 = vmul.f32 %v548, %v554
        %559 = vrot.lane.b32.xlu0 %v555, 16
        %v560 = vpop.permute.xlu0 %559
        %561 = vrot.lane.b32.xlu0 %v556, 16
        %v562 = vpop.permute.xlu0 %561
        %565 = vst.msk [vmem:[%s223] sm:$0xff] %vm262, %v560
        %566 = vst.msk [vmem:[%s223 + $0x8] sm:$0xff] %vm262, %v562
        %s567 = sand.u32 %s128, 1
        %s568 = scalar_lea.sflag [#allocation4], %s567
        %s569 = sand.u32 %s128, 1
        %s570 = smul.addr %s569, 16
        %s571 = scalar_lea.vmem [#allocation3], %s570
        // Predicated region
        $region33: #{tpu_custom_call.1} parent=31 // pred_check
          %p572 = pneg %p138
        $region34: #{tpu_custom_call.1} parent=31 // pred_check_branch
          %574 = sbr.rel (%p572) target = $region36
        $region35: #{tpu_custom_call.1} parent=31 // pred_region
          %s575 = smul.u32 2, %s24
          %s577 = ssub.s32 256, 256
          %578 = vsyncadd %s568, %s577
          %s579 = sadd.s32 %s22, %s575
          %s580 = smul.addr %s23, 2
          %s581 = sadd.s32 %s579, %s580
          %s582 = smul.addr %s581, 128
          %s583 = scalar_lea.hbm %s3, %s582
          %s584 = sshll.u32 %s571, 4
          %s585 = int_to_ptr.vmem [resolvable:$true] %s584
          %590 = dma.vmem_to_hbm [thread:$0]  %s585, 256, %s583, %s568, 128, 128, 8
        $region36: #{tpu_custom_call.1} parent=31 // pred_fallthru
          _
      $region32: #{tpu_custom_call.1} parent=5 // pred_fallthru
        _
      %p591 = scmp.le.s32.totalorder 2, %s12
      // Predicated region
      $region37: #{tpu_custom_call.1} parent=5 // pred_check
        %p592 = pneg %p591
      $region38: #{tpu_custom_call.1} parent=5 // pred_check_branch
        %594 = sbr.rel (%p592) target = $region40
      $region39: #{tpu_custom_call.1} parent=5 // pred_region
        %s595 = ssub.s32 %s12, 2
        // Predicated region
        $region41: #{tpu_custom_call.1} parent=39 // pred_check
          %p596 = pneg %p144
        $region42: #{tpu_custom_call.1} parent=39 // pred_check_branch
          %598 = sbr.rel (%p596) target = $region44
        $region43: #{tpu_custom_call.1} parent=39 // pred_region
          %s599 = sand.u32 %s129, 1
          %s600 = scalar_lea.sflag [#allocation4], %s599
          %s601 = sand.u32 %s129, 1
          %s602 = smul.addr %s601, 16
          %s603 = scalar_lea.vmem [#allocation3], %s602
          %604 = dma.done %s600, 256
        $region44: #{tpu_custom_call.1} parent=39 // pred_fallthru
          _
      $region40: #{tpu_custom_call.1} parent=5 // pred_fallthru
        _
    $region6: #{tpu_custom_call.1} parent=1 // loop_footer
      %s16 = sadd.s32 1, %s12
    $region7: #{tpu_custom_call.1} parent=1 // loop_footer_branch
      %11 = sbr.rel target = $region3
    $region8: #{tpu_custom_call.1} parent=1 // loop_exit
      _
    %605 = vsyncpa [#allocation4], 1
    %s606 = scalar_lea.sflag [#allocation4], 1
    %607 = vsyncpa %s606, 1

</llo_original>
